<compile_context>
chip_gen: v6e
topology: v6e:2x2x1
jax: 0.10.0
libtpu: 0.0.40
codegen_flags: <defaults>
</compile_context>

<pallas_src>
import math

import jax
import jax.numpy as jnp
from jax.experimental import pallas as pl
from jax.experimental.pallas import tpu as pltpu

UNIFORM_SIGMA = 3.46
_LANE = 128


def _rescale_kernel(x_ref, scale_ref, offset_ref, o_ref):
    # scale/offset are (1, Fp) and broadcast over the row (sublane) axis.
    # Single FMA per element: out = x * scale + offset.
    x = x_ref[...].astype(jnp.float32)
    o_ref[...] = x * scale_ref[...] + offset_ref[...]


def _cdiv(a, b):
    return (a + b - 1) // b


def _round_up(n, m):
    return _cdiv(n, m) * m


def _choose_pack_factor(B, F, target_lanes=1024, max_fp=4096):
    """Pick k rows to fold into the lane axis.  Every candidate divides B, so
    the (B, F) -> (B//k, k*F) reshape is a free contiguous view (no copy)."""
    if B <= 1:
        return 1
    base = _LANE // math.gcd(F, _LANE)          # smallest k with (k*F) % 128 == 0
    # Pass 1: lane-dense packing (k*F a multiple of 128), widest first.
    if base * F <= max_fp:
        w_max = max(1, min(target_lanes, max_fp) // (base * F))
        for w in range(w_max, 0, -1):
            k = base * w
            if k <= B and B % k == 0:
                return k
    # Pass 2: F narrower than one vreg lane group -> any divisor of B that
    # widens the row still beats masked 128-lane stores.
    if F < _LANE:
        k_cap = min(B, max(1, target_lanes // F))
        for k in range(k_cap, 1, -1):
            if B % k == 0:
                return k
    return 1


def rescale_input(x, lower_bounds, upper_bounds, *,
                  target_tile_bytes=2 << 20, target_lanes=1024):
    """Pallas equivalent of RescaleInput.forward.

    Handles unbatched (F,) and batched (..., F) inputs, broadcasting the 1D
    bounds over the trailing dimension exactly like the PyTorch module.
    """
    x = jnp.asarray(x)
    lb = jnp.asarray(lower_bounds, jnp.float32)
    ub = jnp.asarray(upper_bounds, jnp.float32)

    orig_shape = x.shape
    F = lb.shape[-1]
    x2 = x.reshape(-1, F)                        # contiguous view, free
    B = x2.shape[0]

    # Fold the per-feature divide into a scale/offset FMA (computed once on (F,)).
    # NOTE: degenerate bounds (ub == lb) produce Inf/NaN, same as the PyTorch module.
    inv = 1.0 / (ub - lb)
    scale = UNIFORM_SIGMA * inv
    offset = (-UNIFORM_SIGMA) * (lb * inv + 0.5)

    if B == 0:                                   # empty batch: nothing to stream
        return (x2.astype(jnp.float32) * scale + offset).reshape(orig_shape)

    # Lane packing: fold k consecutive rows into the lane axis (k divides B).
    k = _choose_pack_factor(B, F, target_lanes=target_lanes)
    Fp, Bp = F * k, B // k
    xp = x2.reshape(Bp, Fp)                      # free contiguous view
    scale_p = jnp.tile(scale, k).reshape(1, Fp)
    offset_p = jnp.tile(offset, k).reshape(1, Fp)

    in_bytes = xp.dtype.itemsize
    sub = max(8, 32 // max(in_bytes, 1))         # sublane granularity: f32 8, bf16 16, int8 32

    # Byte-budgeted row tile (~target_tile_bytes of in+out bytes per grid step).
    row_bytes = Fp * (in_bytes + 4)
    TB = max(sub, (target_tile_bytes // max(row_bytes, 1)) // sub * sub)
    # Keep >= 2 (ideally 4) row-blocks so both v7x TensorCores get work.
    if Bp >= 4 * sub:
        TB = min(TB, _round_up(_cdiv(Bp, 4), sub))
    elif Bp >= 2 * sub:
        TB = min(TB, _round_up(_cdiv(Bp, 2), sub))
    # Never let the block exceed the array; the ragged last block (Bp % TB)
    # is masked by Pallas -- no wrapper-side padding anywhere.
    if Bp <= sub:
        TB = Bp
    else:
        TB = min(TB, (Bp // sub) * sub)

    grid = (_cdiv(Bp, TB),)

    # Scoped-VMEM budget: double-buffered in+out tiles + resident scale/offset.
    need = 2 * TB * Fp * (in_bytes + 4) + 4 * Fp * 4
    vmem_limit = int(min(max(2 * need, 8 << 20), 128 << 20))

    cost = pl.CostEstimate(
        flops=2 * B * F,                         # one FMA per element
        transcendentals=0,
        bytes_accessed=B * F * (in_bytes + 4) + 2 * F * 4,
    )

    out = pl.pallas_call(
        _rescale_kernel,
        out_shape=jax.ShapeDtypeStruct((Bp, Fp), jnp.float32),
        grid=grid,
        in_specs=[
            pl.BlockSpec((TB, Fp), lambda i: (i, 0)),
            pl.BlockSpec((1, Fp), lambda i: (0, 0)),   # scale: resident across row-blocks
            pl.BlockSpec((1, Fp), lambda i: (0, 0)),   # offset: resident across row-blocks
        ],
        out_specs=pl.BlockSpec((TB, Fp), lambda i: (i, 0)),
        compiler_params=pltpu.CompilerParams(
            dimension_semantics=("parallel",),         # shard row-blocks across TCs
            vmem_limit_bytes=vmem_limit,
        ),
        cost_estimate=cost,
    )(xp, scale_p, offset_p)

    return out.reshape(orig_shape)               # free reshape back to caller's shape


if __name__ == "__main__":
    key = jax.random.PRNGKey(0)
    keys = jax.random.split(key, 6)

    def ref_fn(x, lb, ub):
        return ((x.astype(jnp.float32) - lb) / (ub - lb) - 0.5) * UNIFORM_SIGMA

    def check(name, x, lb, ub, atol=1e-4, rtol=1e-5):
        out = jax.block_until_ready(rescale_input(x, lb, ub))
        assert out.shape == x.shape, f"{name}: shape {out.shape} != {x.shape}"
        ref = ref_fn(jnp.asarray(x), lb, ub)
        assert jnp.allclose(out, ref, atol=atol, rtol=rtol), f"{name}: mismatch vs reference"

    feat = 32
    lb = jnp.linspace(-2.0, -0.5, feat, dtype=jnp.float32)
    ub = lb + jnp.linspace(1.0, 3.0, feat, dtype=jnp.float32)

    # Batched 2D (lane-dense packing: k*F is a multiple of 128).
    check("2d", jax.random.uniform(keys[0], (8, feat), jnp.float32, minval=-2.0, maxval=2.0), lb, ub)
    # Unbatched 1D.
    check("1d", jax.random.uniform(keys[1], (feat,), jnp.float32, minval=-2.0, maxval=2.0), lb, ub)
    # Batch with no lane-dense divisor -> divisor packing (k=5), still no padding.
    check("odd", jax.random.uniform(keys[2], (5, feat), jnp.float32, minval=-2.0, maxval=2.0), lb, ub)
    # Larger batch exercising a multi-block grid with a ragged (masked) last block.
    check("ragged", jax.random.uniform(keys[3], (300, feat), jnp.float32, minval=-2.0, maxval=2.0), lb, ub)
    # 3D batch with a sub-32-bit input dtype (in-kernel upcast, 16-row sublane granularity).
    x_bf16 = jax.random.uniform(keys[4], (2, 7, feat), jnp.float32,
                                minval=-2.0, maxval=2.0).astype(jnp.bfloat16)
    check("bf16_3d", x_bf16, lb, ub, atol=1e-3, rtol=1e-4)
    # Feature dim that does not divide 128 (lcm-based lane packing).
    feat96 = 96
    lb96 = jnp.linspace(-1.0, 0.0, feat96, dtype=jnp.float32)
    ub96 = lb96 + jnp.linspace(0.5, 2.0, feat96, dtype=jnp.float32)
    check("f96", jax.random.uniform(keys[5], (6, feat96), jnp.float32,
                                    minval=-1.5, maxval=1.5), lb96, ub96)

    print("KERNEL_OK")
</pallas_src>

<mosaic_0001>
module attributes {stable_mosaic.version = 11 : i64} {
  func.func @_rescale_kernel(%arg0: i32, %arg1: memref<1x256xf32, #tpu.memory_space<vmem>>, %arg2: memref<1x256xf32, #tpu.memory_space<vmem>>, %arg3: memref<1x256xf32, #tpu.memory_space<vmem>>, %arg4: memref<1x256xf32, #tpu.memory_space<vmem>>) attributes {dimension_semantics = [#tpu.dimension_semantics<parallel>], iteration_bounds = array<i64: 1>, scalar_prefetch = 0 : i64, scratch_operands = 0 : i64, tpu.core_type = #tpu.core_type<tc>, window_params = [{transform_indices = @transform_0, window_bounds = array<i64: 1, 256>}, {pipeline_mode = #tpu.pipeline_mode<synchronous>, transform_indices = @transform_1, window_bounds = array<i64: 1, 256>}, {pipeline_mode = #tpu.pipeline_mode<synchronous>, transform_indices = @transform_2, window_bounds = array<i64: 1, 256>}, {transform_indices = @transform_3, window_bounds = array<i64: 1, 256>}]} {
    %c0 = arith.constant 0 : index
    %c0_0 = arith.constant 0 : index
    %0 = vector.load %arg1[%c0, %c0_0] : memref<1x256xf32, #tpu.memory_space<vmem>>, vector<1x256xf32>
    %c0_1 = arith.constant 0 : index
    %c0_2 = arith.constant 0 : index
    %1 = vector.load %arg2[%c0_1, %c0_2] : memref<1x256xf32, #tpu.memory_space<vmem>>, vector<1x256xf32>
    %2 = arith.mulf %0, %1 : vector<1x256xf32>
    %c0_3 = arith.constant 0 : index
    %c0_4 = arith.constant 0 : index
    %3 = vector.load %arg3[%c0_3, %c0_4] : memref<1x256xf32, #tpu.memory_space<vmem>>, vector<1x256xf32>
    %4 = arith.addf %2, %3 : vector<1x256xf32>
    %c0_5 = arith.constant 0 : index
    %c0_6 = arith.constant 0 : index
    %5 = vector.load %arg4[%c0_5, %c0_6] : memref<1x256xf32, #tpu.memory_space<vmem>>, vector<1x256xf32>
    tpu.vector_store %arg4[%c0_5, %c0_6], %4 {strides = array<i32>} : memref<1x256xf32, #tpu.memory_space<vmem>>, vector<1x256xf32>,
    return
  }
  func.func @transform_0(%arg0: i32) -> (i32, i32) {
    %c0_i32 = arith.constant 0 : i32
    %c0_i32_0 = arith.constant 0 : i32
    return %arg0, %c0_i32 : i32, i32
  }
  func.func @transform_1(%arg0: i32) -> (i32, i32) {
    %c0_i32 = arith.constant 0 : i32
    %c0_i32_0 = arith.constant 0 : i32
    %c0_i32_1 = arith.constant 0 : i32
    return %c0_i32, %c0_i32_0 : i32, i32
  }
  func.func @transform_2(%arg0: i32) -> (i32, i32) {
    %c0_i32 = arith.constant 0 : i32
    %c0_i32_0 = arith.constant 0 : i32
    %c0_i32_1 = arith.constant 0 : i32
    return %c0_i32, %c0_i32_0 : i32, i32
  }
  func.func @transform_3(%arg0: i32) -> (i32, i32) {
    %c0_i32 = arith.constant 0 : i32
    %c0_i32_0 = arith.constant 0 : i32
    return %arg0, %c0_i32 : i32, i32
  }
}

</mosaic_0001>

<llo_original>
// kernel: tpu_custom_call.1
$region0: #{tpu_custom_call.1}
  #allocation0 [shape = 'u32[]', space=smem, size = 0x4, offset = 0x4, fixed_abs, tag = 'smem constant byte address 0x4 - core index']
  #allocation1 [shape = 'u32[144,128]{1,0:T(1,128)}', space=vmem, size = 0x12000, scoped, tag = 'internal scratch']
  %s0 = inlined_call_operand.hbm [shape: f32[1,256], index: 0, kind: input, shape index: {}]
  %s1 = inlined_call_operand.hbm [shape: f32[1,256], index: 1, kind: input, shape index: {}]
  %s2 = inlined_call_operand.vmem [shape: f32[1,256], index: 2, kind: input, shape index: {}]
  %s3 = inlined_call_operand.hbm [shape: f32[1,256], index: 3, kind: output, shape index: {}]
  %s4 = sld [smem:[#allocation0]]
  $region30: #{tpu_custom_call.1} parent=0
    _
  %s6 = ssub.s32 1, %s4
  %s7 = scalar_select 0, %s6, %s4
  $region1: #{tpu_custom_call.1} parent=0
    #allocation2 [shape = 'u8[1024]{0}', space=vmem, size = 0x400, scoped, tag = 'input window, operand 0, single buffered']
    #allocation3 [shape = 's32[1]{0}', space=sflag, size = 0x4, scoped, tag = 'scoped memory for tpu_custom_call.1']
    #allocation4 [shape = 's32[1]{0}', space=sflag, size = 0x4, scoped, tag = 'scoped memory for tpu_custom_call.1']
    #allocation5 [shape = 'u8[1024]{0}', space=vmem, size = 0x400, scoped, tag = 'input window, operand 1, single buffered']
    #allocation6 [shape = 's32[1]{0}', space=sflag, size = 0x4, scoped, tag = 'scoped memory for tpu_custom_call.1']
    #allocation7 [shape = 'u8[1024]{0}', space=vmem, size = 0x400, scoped, tag = 'output window, operand 0, single buffered']
    %8 = vsyncpa [#allocation3], 0
    %9 = vsyncpa [#allocation6], 0
    %10 = vsyncpa [#allocation4], 0
    // Predicated region
    $region2: #{tpu_custom_call.1} parent=1 // pred_check
      _
    $region3: #{tpu_custom_call.1} parent=1 // pred_check_branch
      %12 = sbr.rel (0) target = $region5
    $region4: #{tpu_custom_call.1} parent=1 // pred_region
      %s14 = ssub.s32 32, 32
      %15 = vsyncadd [#allocation3], %s14
      %s17 = sshll.u32 [#allocation2], 4
      %s18 = int_to_ptr.vmem [resolvable:$true] %s17
      %20 = dma.hbm_to_vmem [thread:$0]  %s0, 32, %s18, [#allocation3]
    $region5: #{tpu_custom_call.1} parent=1 // pred_fallthru
      _
    // Predicated region
    $region6: #{tpu_custom_call.1} parent=1 // pred_check
      _
    $region7: #{tpu_custom_call.1} parent=1 // pred_check_branch
      %22 = sbr.rel (0) target = $region9
    $region8: #{tpu_custom_call.1} parent=1 // pred_region
      %s24 = ssub.s32 32, 32
      %25 = vsyncadd [#allocation6], %s24
      %s27 = sshll.u32 [#allocation5], 4
      %s28 = int_to_ptr.vmem [resolvable:$true] %s27
      %30 = dma.hbm_to_vmem [thread:$0]  %s1, 32, %s28, [#allocation6]
    $region9: #{tpu_custom_call.1} parent=1 // pred_fallthru
      _
    // Predicated region
    $region10: #{tpu_custom_call.1} parent=1 // pred_check
      _
    $region11: #{tpu_custom_call.1} parent=1 // pred_check_branch
      %32 = sbr.rel (0) target = $region13
    $region12: #{tpu_custom_call.1} parent=1 // pred_region
      _
    $region13: #{tpu_custom_call.1} parent=1 // pred_fallthru
      _
    // Predicated region
    $region14: #{tpu_custom_call.1} parent=1 // pred_check
      _
    $region15: #{tpu_custom_call.1} parent=1 // pred_check_branch
      %34 = sbr.rel (0) target = $region17
    $region16: #{tpu_custom_call.1} parent=1 // pred_region
      %35 = dma.done [#allocation3], 32
    $region17: #{tpu_custom_call.1} parent=1 // pred_fallthru
      _
    // Predicated region
    $region18: #{tpu_custom_call.1} parent=1 // pred_check
      _
    $region19: #{tpu_custom_call.1} parent=1 // pred_check_branch
      %37 = sbr.rel (0) target = $region21
    $region20: #{tpu_custom_call.1} parent=1 // pred_region
      %38 = dma.done [#allocation6], 32
    $region21: #{tpu_custom_call.1} parent=1 // pred_fallthru
      _
    %v39 = vld [vmem:[#allocation2] sm:$0x3]
    %v40 = vld [vmem:[#allocation5] sm:$0x3]
    %v41 = vmul.f32 %v39, %v40
    %v42 = vld [vmem:[%s2] sm:$0x3]
    %v43 = vadd.f32 %v41, %v42
    %v44 = vlaneseq
    %vm45 = vcmp.ge.s32.totalorder %v44, 0
    %vm46 = vcmp.lt.s32.totalorder %v44, 256
    %vm47 = vmand %vm45, %vm46
    %48 = vst.msk [vmem:[#allocation7] sm:$0x3] %vm47, %v43
    // Predicated region
    $region22: #{tpu_custom_call.1} parent=1 // pred_check
      _
    $region23: #{tpu_custom_call.1} parent=1 // pred_check_branch
      %50 = sbr.rel (0) target = $region25
    $region24: #{tpu_custom_call.1} parent=1 // pred_region
      %s52 = ssub.s32 32, 32
      %53 = vsyncadd [#allocation4], %s52
      %s55 = sshll.u32 [#allocation7], 4
      %s56 = int_to_ptr.vmem [resolvable:$true] %s55
      %58 = dma.vmem_to_hbm [thread:$0]  %s56, 32, %s3, [#allocation4]
    $region25: #{tpu_custom_call.1} parent=1 // pred_fallthru
      _
    // Predicated region
    $region26: #{tpu_custom_call.1} parent=1 // pred_check
      _
    $region27: #{tpu_custom_call.1} parent=1 // pred_check_branch
      %60 = sbr.rel (0) target = $region29
    $region28: #{tpu_custom_call.1} parent=1 // pred_region
      %61 = dma.done [#allocation4], 32
    $region29: #{tpu_custom_call.1} parent=1 // pred_fallthru
      _
    %62 = vsyncpa [#allocation3], 1
    %63 = vsyncpa [#allocation6], 1
    %64 = vsyncpa [#allocation4], 1

</llo_original>
